<compile_context>
chip_gen: v7x
topology: tpu7x:2x2x1
jax: 0.10.0
libtpu: 0.0.40
codegen_flags: <defaults>
</compile_context>

<pallas_src>
import jax
import jax.numpy as jnp
from jax.experimental import pallas as pl
from jax.experimental.pallas import tpu as pltpu


def mlp_softmax_kernel(x_ref, w1_ref, b1_ref, w2_ref, b2_ref, o_ref):
    # fc1: Linear + ReLU (hidden dim pre-padded to a full 128-lane vreg width)
    h = jnp.dot(x_ref[...], w1_ref[...], preferred_element_type=jnp.float32)
    h = jnp.maximum(h + b1_ref[...], 0.0)
    # out: Linear straight to the true (tiny) number of actions.
    logits = jnp.dot(h, w2_ref[...], preferred_element_type=jnp.float32)
    logits = logits + b2_ref[...]
    # Numerically stable row-wise softmax with an EXACT divide (these probs
    # feed a log-prob loss on the host, and approx reciprocal broke the
    # 1e-3 correctness check).
    m = jnp.max(logits, axis=-1, keepdims=True)
    e = jnp.exp(logits - m)
    o_ref[...] = (e / jnp.sum(e, axis=-1, keepdims=True)).astype(o_ref.dtype)


def prepare_params(w1, b1, w2, b2, *, lane=128):
    """Pad only the hidden dim to a full lane width (128).

    w1: (in, hidden)  b1: (1, hidden)  w2: (hidden, out)  b2: (1, out)
    Zero-padded hidden columns are inert: ReLU(0)=0 and the matching w2 rows
    are zero.  The output dim keeps its true size (no masking, no post-slice).
    """
    in_f, hidden = w1.shape
    out_f = w2.shape[1]
    hp = max(lane, ((hidden + lane - 1) // lane) * lane)
    w1p = jnp.zeros((in_f, hp), w1.dtype).at[:, :hidden].set(w1)
    b1p = jnp.zeros((1, hp), b1.dtype).at[:, :hidden].set(b1.reshape(1, hidden))
    w2p = jnp.zeros((hp, out_f), w2.dtype).at[:hidden, :].set(w2)
    b2p = b2.reshape(1, out_f)
    return w1p, b1p, w2p, b2p


def model_forward(x, w1p, b1p, w2p, b2p, *, tb=None):
    """Batched policy forward.  x: (B, in_features) f32 -> (B, out_features)."""
    B, in_f = x.shape
    hp = w1p.shape[1]
    out_f = w2p.shape[1]

    # Single grid step for small batches (the problem is launch-overhead bound,
    # not compute bound); tile only when the batch is genuinely large.
    if tb is None:
        tb = B if B <= 1024 else 1024
    tb = min(tb, B)
    # Partial last block is fine: softmax is strictly row-wise and Pallas masks
    # the overrun writes, so no jnp.pad / slice wrapper passes are needed.
    grid = (pl.cdiv(B, tb),)

    bytes_f32 = 4
    cost = pl.CostEstimate(
        flops=2 * B * (in_f * hp + hp * out_f),
        transcendentals=B * out_f,
        bytes_accessed=bytes_f32 * (x.size + w1p.size + b1p.size
                                    + w2p.size + b2p.size + B * out_f),
    )

    return pl.pallas_call(
        mlp_softmax_kernel,
        out_shape=jax.ShapeDtypeStruct((B, out_f), jnp.float32),
        grid=grid,
        in_specs=[
            pl.BlockSpec((tb, in_f), lambda i: (i, 0)),    # x batch tile
            pl.BlockSpec((in_f, hp), lambda i: (0, 0)),    # w1 (resident)
            pl.BlockSpec((1, hp), lambda i: (0, 0)),       # b1
            pl.BlockSpec((hp, out_f), lambda i: (0, 0)),   # w2 (128 x 2)
            pl.BlockSpec((1, out_f), lambda i: (0, 0)),    # b2
        ],
        out_specs=pl.BlockSpec((tb, out_f), lambda i: (i, 0)),
        compiler_params=pltpu.CompilerParams(
            dimension_semantics=("parallel",)),
        cost_estimate=cost,
    )(x, w1p, b1p, w2p, b2p)


def init_params(key, in_features, hidden, out_features):
    """Deterministic parameter init (PyTorch-like uniform fan-in bounds)."""
    k1, k2, k3, k4 = jax.random.split(key, 4)
    bound1 = 1.0 / jnp.sqrt(in_features)
    bound2 = 1.0 / jnp.sqrt(hidden)
    w1 = jax.random.uniform(k1, (in_features, hidden), jnp.float32, -bound1, bound1)
    b1 = jax.random.uniform(k2, (1, hidden), jnp.float32, -bound1, bound1)
    w2 = jax.random.uniform(k3, (hidden, out_features), jnp.float32, -bound2, bound2)
    b2 = jax.random.uniform(k4, (1, out_features), jnp.float32, -bound2, bound2)
    return w1, b1, w2, b2


if __name__ == "__main__":
    # CartPole REINFORCE policy: state dim 4 -> hidden 64 -> 2 actions.
    B, in_features, hidden, out_features = 8, 4, 64, 2
    key = jax.random.PRNGKey(0)
    kx, kp = jax.random.split(key)
    x = jax.random.normal(kx, (B, in_features), jnp.float32)
    w1, b1, w2, b2 = init_params(kp, in_features, hidden, out_features)

    # TODO(synk): _train / Adam / Categorical sampling / _make_batch are host-side
    # REINFORCE bookkeeping outside forward() and are intentionally not kernelized.
    w1p, b1p, w2p, b2p = prepare_params(w1, b1, w2, b2)
    probs = model_forward(x, w1p, b1p, w2p, b2p)
    jax.block_until_ready(probs)

    # reference check against plain JAX (unpadded math)
    h_ref = jnp.maximum(x @ w1 + b1, 0.0)
    ref = jax.nn.softmax(h_ref @ w2 + b2, axis=-1)
    assert probs.shape == (B, out_features)
    assert jnp.allclose(probs, ref, atol=1e-3, rtol=1e-3)
    assert jnp.allclose(jnp.sum(probs, axis=-1), 1.0, atol=1e-3)

    print("KERNEL_OK")
</pallas_src>

<mosaic_0001>
module attributes {stable_mosaic.version = 11 : i64} {
  func.func @mlp_softmax_kernel(%arg0: i32, %arg1: memref<8x4xf32, #tpu.memory_space<vmem>>, %arg2: memref<4x128xf32, #tpu.memory_space<vmem>>, %arg3: memref<1x128xf32, #tpu.memory_space<vmem>>, %arg4: memref<128x2xf32, #tpu.memory_space<vmem>>, %arg5: memref<1x2xf32, #tpu.memory_space<vmem>>, %arg6: memref<8x2xf32, #tpu.memory_space<vmem>>) attributes {dimension_semantics = [#tpu.dimension_semantics<parallel>], iteration_bounds = array<i64: 1>, scalar_prefetch = 0 : i64, scratch_operands = 0 : i64, tpu.core_type = #tpu.core_type<tc>, window_params = [{transform_indices = @transform_0, window_bounds = array<i64: 8, 4>}, {pipeline_mode = #tpu.pipeline_mode<synchronous>, transform_indices = @transform_1, window_bounds = array<i64: 4, 128>}, {pipeline_mode = #tpu.pipeline_mode<synchronous>, transform_indices = @transform_2, window_bounds = array<i64: 1, 128>}, {pipeline_mode = #tpu.pipeline_mode<synchronous>, transform_indices = @transform_3, window_bounds = array<i64: 128, 2>}, {pipeline_mode = #tpu.pipeline_mode<synchronous>, transform_indices = @transform_4, window_bounds = array<i64: 1, 2>}, {transform_indices = @transform_5, window_bounds = array<i64: 8, 2>}]} {
    %c0 = arith.constant 0 : index
    %c0_0 = arith.constant 0 : index
    %0 = vector.load %arg1[%c0, %c0_0] : memref<8x4xf32, #tpu.memory_space<vmem>>, vector<8x4xf32>
    %c0_1 = arith.constant 0 : index
    %c0_2 = arith.constant 0 : index
    %1 = vector.load %arg2[%c0_1, %c0_2] : memref<4x128xf32, #tpu.memory_space<vmem>>, vector<4x128xf32>
    %cst = arith.constant dense<0.000000e+00> : vector<8x128xf32>
    %2 = tpu.matmul %0, %1, %cst {dimension_numbers = #tpu.dot_dimension_numbers<[1], [0], [0], [1], [0, 0, 1, 1], [], []>} : vector<8x4xf32>, vector<4x128xf32>, vector<8x128xf32> -> vector<8x128xf32>
    %c0_3 = arith.constant 0 : index
    %c0_4 = arith.constant 0 : index
    %3 = vector.load %arg3[%c0_3, %c0_4] : memref<1x128xf32, #tpu.memory_space<vmem>>, vector<1x128xf32>
    %4 = vector.broadcast %3 : vector<1x128xf32> to vector<8x128xf32>
    %5 = arith.addf %2, %4 : vector<8x128xf32>
    %cst_5 = arith.constant 0.000000e+00 : f32
    %6 = vector.broadcast %cst_5 : f32 to vector<8x128xf32>
    %7 = arith.maximumf %5, %6 : vector<8x128xf32>
    %c0_6 = arith.constant 0 : index
    %c0_7 = arith.constant 0 : index
    %8 = vector.load %arg4[%c0_6, %c0_7] : memref<128x2xf32, #tpu.memory_space<vmem>>, vector<128x2xf32>
    %cst_8 = arith.constant dense<0.000000e+00> : vector<8x2xf32>
    %9 = tpu.matmul %7, %8, %cst_8 {dimension_numbers = #tpu.dot_dimension_numbers<[1], [0], [0], [1], [0, 0, 1, 1], [], []>} : vector<8x128xf32>, vector<128x2xf32>, vector<8x2xf32> -> vector<8x2xf32>
    %c0_9 = arith.constant 0 : index
    %c0_10 = arith.constant 0 : index
    %10 = vector.load %arg5[%c0_9, %c0_10] : memref<1x2xf32, #tpu.memory_space<vmem>>, vector<1x2xf32>
    %11 = vector.broadcast %10 : vector<1x2xf32> to vector<8x2xf32>
    %12 = arith.addf %9, %11 : vector<8x2xf32>
    %cst_11 = arith.constant dense<0xFF800000> : vector<8xf32>
    %13 = vector.multi_reduction <maximumf>, %12, %cst_11 [1] : vector<8x2xf32> to vector<8xf32>
    %14 = vector.shape_cast %13 : vector<8xf32> to vector<8x1xf32>
    %15 = vector.broadcast %14 : vector<8x1xf32> to vector<8x2xf32>
    %16 = arith.subf %12, %15 : vector<8x2xf32>
    %17 = math.exp %16 : vector<8x2xf32>
    %cst_12 = arith.constant dense<0.000000e+00> : vector<8xf32>
    %18 = vector.multi_reduction <add>, %17, %cst_12 [1] : vector<8x2xf32> to vector<8xf32>
    %19 = vector.shape_cast %18 : vector<8xf32> to vector<8x1xf32>
    %20 = vector.broadcast %19 : vector<8x1xf32> to vector<8x2xf32>
    %21 = arith.divf %17, %20 : vector<8x2xf32>
    %c0_13 = arith.constant 0 : index
    %c0_14 = arith.constant 0 : index
    %22 = vector.load %arg6[%c0_13, %c0_14] : memref<8x2xf32, #tpu.memory_space<vmem>>, vector<8x2xf32>
    tpu.vector_store %arg6[%c0_13, %c0_14], %21 {strides = array<i32>} : memref<8x2xf32, #tpu.memory_space<vmem>>, vector<8x2xf32>,
    return
  }
  func.func @transform_0(%arg0: i32) -> (i32, i32) {
    %c0_i32 = arith.constant 0 : i32
    %c0_i32_0 = arith.constant 0 : i32
    return %arg0, %c0_i32 : i32, i32
  }
  func.func @transform_1(%arg0: i32) -> (i32, i32) {
    %c0_i32 = arith.constant 0 : i32
    %c0_i32_0 = arith.constant 0 : i32
    %c0_i32_1 = arith.constant 0 : i32
    return %c0_i32, %c0_i32_0 : i32, i32
  }
  func.func @transform_2(%arg0: i32) -> (i32, i32) {
    %c0_i32 = arith.constant 0 : i32
    %c0_i32_0 = arith.constant 0 : i32
    %c0_i32_1 = arith.constant 0 : i32
    return %c0_i32, %c0_i32_0 : i32, i32
  }
  func.func @transform_3(%arg0: i32) -> (i32, i32) {
    %c0_i32 = arith.constant 0 : i32
    %c0_i32_0 = arith.constant 0 : i32
    %c0_i32_1 = arith.constant 0 : i32
    return %c0_i32, %c0_i32_0 : i32, i32
  }
  func.func @transform_4(%arg0: i32) -> (i32, i32) {
    %c0_i32 = arith.constant 0 : i32
    %c0_i32_0 = arith.constant 0 : i32
    %c0_i32_1 = arith.constant 0 : i32
    return %c0_i32, %c0_i32_0 : i32, i32
  }
  func.func @transform_5(%arg0: i32) -> (i32, i32) {
    %c0_i32 = arith.constant 0 : i32
    %c0_i32_0 = arith.constant 0 : i32
    return %arg0, %c0_i32 : i32, i32
  }
}

</mosaic_0001>

<llo_original>
// kernel: tpu_custom_call.1
$region0: #{tpu_custom_call.1}
  #allocation0 [shape = 'u32[]', space=smem, size = 0x4, offset = 0x4, fixed_abs, tag = 'smem constant byte address 0x4 - core index']
  #allocation1 [shape = 'u32[144,128]{1,0:T(1,128)}', space=vmem, size = 0x12000, scoped, tag = 'internal scratch']
  %s0 = inlined_call_operand.vmem [shape: f32[8,4], index: 0, kind: input, shape index: {}]
  %s1 = inlined_call_operand.vmem [shape: f32[4,128], index: 1, kind: input, shape index: {}]
  %s2 = inlined_call_operand.vmem [shape: f32[1,128], index: 2, kind: input, shape index: {}]
  %s3 = inlined_call_operand.vmem [shape: f32[128,2], index: 3, kind: input, shape index: {}]
  %s4 = inlined_call_operand.vmem [shape: f32[1,2], index: 4, kind: input, shape index: {}]
  %s5 = inlined_call_operand.vmem [shape: f32[8,2], index: 5, kind: output, shape index: {}]
  %s6 = sld [smem:[#allocation0]]
  $region30: #{tpu_custom_call.1} parent=0
    _
  %s8 = ssub.s32 1, %s6
  %s9 = scalar_select 0, %s8, %s6
  // Predicated region
  $region2: #{tpu_custom_call.1} parent=0 // pred_check
    _
  $region3: #{tpu_custom_call.1} parent=0 // pred_check_branch
    %11 = sbr.rel (0) target = $region5
  $region4: #{tpu_custom_call.1} parent=0 // pred_region
    _
  $region5: #{tpu_custom_call.1} parent=0 // pred_fallthru
    _
  // Predicated region
  $region6: #{tpu_custom_call.1} parent=0 // pred_check
    _
  $region7: #{tpu_custom_call.1} parent=0 // pred_check_branch
    %13 = sbr.rel (0) target = $region9
  $region8: #{tpu_custom_call.1} parent=0 // pred_region
    _
  $region9: #{tpu_custom_call.1} parent=0 // pred_fallthru
    _
  // Predicated region
  $region10: #{tpu_custom_call.1} parent=0 // pred_check
    _
  $region11: #{tpu_custom_call.1} parent=0 // pred_check_branch
    %15 = sbr.rel (0) target = $region13
  $region12: #{tpu_custom_call.1} parent=0 // pred_region
    _
  $region13: #{tpu_custom_call.1} parent=0 // pred_fallthru
    _
  // Predicated region
  $region14: #{tpu_custom_call.1} parent=0 // pred_check
    _
  $region15: #{tpu_custom_call.1} parent=0 // pred_check_branch
    %17 = sbr.rel (0) target = $region17
  $region16: #{tpu_custom_call.1} parent=0 // pred_region
    _
  $region17: #{tpu_custom_call.1} parent=0 // pred_fallthru
    _
  // Predicated region
  $region18: #{tpu_custom_call.1} parent=0 // pred_check
    _
  $region19: #{tpu_custom_call.1} parent=0 // pred_check_branch
    %19 = sbr.rel (0) target = $region21
  $region20: #{tpu_custom_call.1} parent=0 // pred_region
    _
  $region21: #{tpu_custom_call.1} parent=0 // pred_fallthru
    _
  %v20 = vld [vmem:[%s0] sm:$0xff]
  %v21 = vld [vmem:[%s1] sm:$0xf]
  %v22 = vld [vmem:[%s2] sm:$0x1]
  %v24 = vlaneseq
  %v25 = vshrl.u32 %v24, 7
  %v26 = vsub.s32 0, %v25
  %v27 = vrot.slane %v22, %v26
  %vm29 = vcmask 31744
  %v31 = vsel %vm29, %v20, 0
  %vm33 = vcmask 1043456
  %v35 = vsel %vm33, %v21, 0
  %37 = vmatprep.subr.mxu0 0.0
  %38 = vmatpush1.msra.mxu0 %v35
  %39 = vmatprep.subr.mxu0 0.0
  %40 = vmatpush1.msra.mxu0 0.0
  %41 = vmatprep.subr.mxu0 0.0
  %42 = vmatpush1.msra.mxu0 0.0
  %43 = vmatprep.subr.mxu0 0.0
  %44 = vmatpush1.msra.mxu0 0.0
  %45 = vmatprep.subr.mxu0 0.0
  %46 = vmatpush1.msra.mxu0 0.0
  %47 = vmatprep.subr.mxu0 0.0
  %48 = vmatpush1.msra.mxu0 0.0
  %49 = vmatprep.subr.mxu0 0.0
  %50 = vmatpush1.msra.mxu0 0.0
  %51 = vmatprep.subr.mxu0 0.0
  %52 = vmatpush1.msra.mxu0 0.0
  %53 = vmatprep.subr.mxu0 0.0
  %54 = vmatpush1.msra.mxu0 0.0
  %55 = vmatprep.subr.mxu0 0.0
  %56 = vmatpush1.msra.mxu0 0.0
  %57 = vmatprep.subr.mxu0 0.0
  %58 = vmatpush1.msra.mxu0 0.0
  %59 = vmatprep.subr.mxu0 0.0
  %60 = vmatpush1.msra.mxu0 0.0
  %61 = vmatprep.subr.mxu0 0.0
  %62 = vmatpush1.msra.mxu0 0.0
  %63 = vmatprep.subr.mxu0 0.0
  %64 = vmatpush1.msra.mxu0 0.0
  %65 = vmatprep.subr.mxu0 0.0
  %66 = vmatpush1.msra.mxu0 0.0
  %67 = vmatprep.subr.mxu0 0.0
  %68 = vmatpush1.msra.mxu0 0.0
  %69 = vmatprep.subr.mxu0 0.0
  %70 = vmatpush1.msra.mxu0 0.0
  %71 = vmatprep.subr.mxu0 0.0
  %72 = vmatpush1.msra.mxu0 0.0
  %73 = vmatprep.subr.mxu0 0.0
  %74 = vmatpush1.msra.mxu0 0.0
  %75 = vmatprep.subr.mxu0 0.0
  %76 = vmatpush1.msra.mxu0 0.0
  %77 = vmatprep.subr.mxu0 0.0
  %78 = vmatpush1.msra.mxu0 0.0
  %79 = vmatprep.subr.mxu0 0.0
  %80 = vmatpush1.msra.mxu0 0.0
  %81 = vmatprep.subr.mxu0 0.0
  %82 = vmatpush1.msra.mxu0 0.0
  %83 = vmatprep.subr.mxu0 0.0
  %84 = vmatpush1.msra.mxu0 0.0
  %85 = vmatprep.subr.mxu0 0.0
  %86 = vmatpush1.msra.mxu0 0.0
  %87 = vmatprep.subr.mxu0 0.0
  %88 = vmatpush1.msra.mxu0 0.0
  %89 = vmatprep.subr.mxu0 0.0
  %90 = vmatpush1.msra.mxu0 0.0
  %91 = vmatprep.subr.mxu0 0.0
  %92 = vmatpush1.msra.mxu0 0.0
  %93 = vmatprep.subr.mxu0 0.0
  %94 = vmatpush1.msra.mxu0 0.0
  %95 = vmatprep.subr.mxu0 0.0
  %96 = vmatpush1.msra.mxu0 0.0
  %97 = vmatprep.subr.mxu0 0.0
  %98 = vmatpush1.msra.mxu0 0.0
  %99 = vmatprep.subr.mxu0 0.0
  %100 = vmatpush1.msra.mxu0 0.0
  %101 = vmatprep.mubr.f32.mxu0 0.0
  %102 = vmatmul.mubr.f32.gmra.mrb[0].mxu0 %v31
  %v103 = vpop.f32.mrb[0].mxu0
  %v104 = vadd.f32 %v27, %v103
  %v105 = vpop.f32.mrb[0].mxu0
  %106 = vdwg.mxu0
  %v107 = vmax.f32 %v104, 0.0
  %v108 = vld [vmem:[%s3] sm:$0xff]
  %v109 = vld [vmem:[%s3 + $0x8] sm:$0xff]
  %v110 = vld [vmem:[%s3 + $0x10] sm:$0xff]
  %v111 = vld [vmem:[%s3 + $0x18] sm:$0xff]
  %v112 = vld [vmem:[%s3 + $0x20] sm:$0xff]
  %v113 = vld [vmem:[%s3 + $0x28] sm:$0xff]
  %v114 = vld [vmem:[%s3 + $0x30] sm:$0xff]
  %v115 = vld [vmem:[%s3 + $0x38] sm:$0xff]
  %v116 = vld [vmem:[%s3 + $0x40] sm:$0xff]
  %v117 = vld [vmem:[%s3 + $0x48] sm:$0xff]
  %v118 = vld [vmem:[%s3 + $0x50] sm:$0xff]
  %v119 = vld [vmem:[%s3 + $0x58] sm:$0xff]
  %v120 = vld [vmem:[%s3 + $0x60] sm:$0xff]
  %v121 = vld [vmem:[%s3 + $0x68] sm:$0xff]
  %v122 = vld [vmem:[%s3 + $0x70] sm:$0xff]
  %v123 = vld [vmem:[%s3 + $0x78] sm:$0xff]
  %v124 = vld [vmem:[%s4] sm:$0x1]
  %v126 = vlaneseq
  %v127 = vshrl.u32 %v126, 7
  %v128 = vsub.s32 0, %v127
  %v129 = vrot.slane %v124, %v128
  %131 = vmatprep.subr.mxu0 0.0
  %132 = vmatpush1.msra.mxu0 %v108
  %133 = vmatprep.subr.mxu0 0.0
  %134 = vmatpush1.msra.mxu0 %v109
  %135 = vmatprep.subr.mxu0 0.0
  %136 = vmatpush1.msra.mxu0 %v110
  %137 = vmatprep.subr.mxu0 0.0
  %138 = vmatpush1.msra.mxu0 %v111
  %139 = vmatprep.subr.mxu0 0.0
  %140 = vmatpush1.msra.mxu0 %v112
  %141 = vmatprep.subr.mxu0 0.0
  %142 = vmatpush1.msra.mxu0 %v113
  %143 = vmatprep.subr.mxu0 0.0
  %144 = vmatpush1.msra.mxu0 %v114
  %145 = vmatprep.subr.mxu0 0.0
  %146 = vmatpush1.msra.mxu0 %v115
  %147 = vmatprep.subr.mxu0 0.0
  %148 = vmatpush1.msra.mxu0 %v116
  %149 = vmatprep.subr.mxu0 0.0
  %150 = vmatpush1.msra.mxu0 %v117
  %151 = vmatprep.subr.mxu0 0.0
  %152 = vmatpush1.msra.mxu0 %v118
  %153 = vmatprep.subr.mxu0 0.0
  %154 = vmatpush1.msra.mxu0 %v119
  %155 = vmatprep.subr.mxu0 0.0
  %156 = vmatpush1.msra.mxu0 %v120
  %157 = vmatprep.subr.mxu0 0.0
  %158 = vmatpush1.msra.mxu0 %v121
  %159 = vmatprep.subr.mxu0 0.0
  %160 = vmatpush1.msra.mxu0 %v122
  %161 = vmatprep.subr.mxu0 0.0
  %162 = vmatpush1.msra.mxu0 %v123
  %163 = vmatprep.subr.mxu0 0.0
  %164 = vmatpush1.msra.mxu0 0.0
  %165 = vmatprep.subr.mxu0 0.0
  %166 = vmatpush1.msra.mxu0 0.0
  %167 = vmatprep.subr.mxu0 0.0
  %168 = vmatpush1.msra.mxu0 0.0
  %169 = vmatprep.subr.mxu0 0.0
  %170 = vmatpush1.msra.mxu0 0.0
  %171 = vmatprep.subr.mxu0 0.0
  %172 = vmatpush1.msra.mxu0 0.0
  %173 = vmatprep.subr.mxu0 0.0
  %174 = vmatpush1.msra.mxu0 0.0
  %175 = vmatprep.subr.mxu0 0.0
  %176 = vmatpush1.msra.mxu0 0.0
  %177 = vmatprep.subr.mxu0 0.0
  %178 = vmatpush1.msra.mxu0 0.0
  %179 = vmatprep.subr.mxu0 0.0
  %180 = vmatpush1.msra.mxu0 0.0
  %181 = vmatprep.subr.mxu0 0.0
  %182 = vmatpush1.msra.mxu0 0.0
  %183 = vmatprep.subr.mxu0 0.0
  %184 = vmatpush1.msra.mxu0 0.0
  %185 = vmatprep.subr.mxu0 0.0
  %186 = vmatpush1.msra.mxu0 0.0
  %187 = vmatprep.subr.mxu0 0.0
  %188 = vmatpush1.msra.mxu0 0.0
  %189 = vmatprep.subr.mxu0 0.0
  %190 = vmatpush1.msra.mxu0 0.0
  %191 = vmatprep.subr.mxu0 0.0
  %192 = vmatpush1.msra.mxu0 0.0
  %193 = vmatprep.subr.mxu0 0.0
  %194 = vmatpush1.msra.mxu0 0.0
  %195 = vmatprep.mubr.f32.mxu0 0.0
  %196 = vmatmul.mubr.f32.gmra.mrb[0].mxu0 %v107
  %v197 = vpop.f32.mrb[0].mxu0
  %v198 = vadd.f32 %v129, %v197
  %v199 = vpop.f32.mrb[0].mxu0
  %200 = vdwg.mxu0
  %vm201 = vcmask 15360
  %v202 = vsel %vm201, %v198, -inf
  %203 = vmax.xlane.f32.xlu0 %v202
  %v204 = vpop.xlane.xlu0 %203
  %v205 = vsub.f32 %v198, %v204
  %v206 = vmul.f32 %v205, 1.442695
  %v207 = vpow.pop %v206
  %v208 = vsel %vm201, %v207, 0.0
  %209 = vadd.xlane.f32.xlu0 %v208
  %v210 = vpop.xlane.xlu0 %209
  %v211 = vrcp.pop %v210
  %v212 = vmul.f32 %v207, %v211
  %213 = vst.msk [vmem:[%s5] sm:$0xff] %vm201, %v212
  // Predicated region
  $region22: #{tpu_custom_call.1} parent=0 // pred_check
    _
  $region23: #{tpu_custom_call.1} parent=0 // pred_check_branch
    %215 = sbr.rel (0) target = $region25
  $region24: #{tpu_custom_call.1} parent=0 // pred_region
    _
  $region25: #{tpu_custom_call.1} parent=0 // pred_fallthru
    _
  // Predicated region
  $region26: #{tpu_custom_call.1} parent=0 // pred_check
    _
  $region27: #{tpu_custom_call.1} parent=0 // pred_check_branch
    %217 = sbr.rel (0) target = $region29
  $region28: #{tpu_custom_call.1} parent=0 // pred_region
    _
  $region29: #{tpu_custom_call.1} parent=0 // pred_fallthru
    _

</llo_original>
